<compile_context>
chip_gen: v5e
topology: v5e:2x2
jax: 0.10.0
libtpu: 0.0.40
codegen_flags: <defaults>
</compile_context>

<pallas_src>
import functools

import jax
import jax.numpy as jnp
from jax import lax
from jax.experimental import pallas as pl
from jax.experimental.pallas import tpu as pltpu

FOCAL_GAMMA = 2.0          # tp focal weight (1 - pt)^2
SL_GAMMA = 3.0             # sl focal weight (1 - pt)^3  (= focal_gamma * 1.5)
SL_WEIGHT = 1.5

_LANE = 128                # vreg lane width
_CHUNK_ROWS = 256          # in-kernel compute chunk (bounds temporaries to ~128 KiB/stream)


def _focal_terms(p, t, *, cube):
    """Per-element focal-BCE term (sum-reducible; padding with p=1,t=1 gives 0).

    Contract: targets are hard {0,1}.  For such labels torch's two-term clamped
    BCE collapses to a single clamped log of pt = where(t==1, p, 1-p), halving
    EUP work.  The focal pow is strength-reduced to explicit multiplies since
    gamma is a compile-time constant (2.0 or 3.0).
    """
    p = p.astype(jnp.float32)
    t = t.astype(jnp.float32)
    pt = jnp.where(t == 1.0, p, 1.0 - p)
    bce = -jnp.maximum(jnp.log(pt), -100.0)       # torch clamps log terms at -100
    x = 1.0 - pt
    w = x * x * x if cube else x * x
    return w * bce


def _trading_loss_kernel(tp_p_ref, tp_t_ref, sl_p_ref, sl_t_ref, out_ref, acc_ref,
                         *, tile_rows, chunk_rows, rows, tp_inv_n, sl_inv_n):
    half = pl.program_id(0)            # row-tile half (maps to a TensorCore on v7x)
    i = pl.program_id(1)               # tile index within this half
    spc = pl.num_programs(1)           # tiles per half
    step = half * spc + i              # intended (unclamped) global row-tile index

    @pl.when(i == 0)
    def _init():
        acc_ref[...] = jnp.zeros_like(acc_ref)

    # Streaming per-chunk accumulation: temporaries stay chunk-sized, the fold
    # is pure VALU (reshape matches native (8,128) vreg slabs), and the (8,128)
    # accumulator defers all cross-lane/sublane reduction to the epilogue.
    row_ids = lax.broadcasted_iota(jnp.int32, (chunk_rows, _LANE), 0)   # hoisted
    tile_base = step * tile_rows

    @pl.loop(0, tile_rows // chunk_rows)
    def _chunk(s):
        r0 = pl.multiple_of(s * chunk_rows, chunk_rows)
        contrib = _focal_terms(tp_p_ref[pl.ds(r0, chunk_rows), :],
                               tp_t_ref[pl.ds(r0, chunk_rows), :], cube=False)
        # Mask rows past the true row count: covers the ragged last tile and
        # (for odd tile counts) the second half's clamped overshoot tile.
        valid = (tile_base + r0 + row_ids) < rows
        contrib = jnp.where(valid, contrib, 0.0)
        acc_ref[...] += contrib.reshape(chunk_rows // 8, 8, _LANE).sum(axis=0)

    @pl.when(i == spc - 1)
    def _finalize():
        # Per-half pre-normalized partial; half 0 also carries the tiny,
        # VMEM-resident sl term in element [0, 0].  Wrapper just sums.
        sl_sum = jnp.sum(_focal_terms(sl_p_ref[...], sl_t_ref[...], cube=True))
        sl_term = jnp.where(half == 0, SL_WEIGHT * (sl_sum * sl_inv_n), 0.0)
        r8 = lax.broadcasted_iota(jnp.int32, (8, _LANE), 0)
        c8 = lax.broadcasted_iota(jnp.int32, (8, _LANE), 1)
        onehot = (r8 == 0) & (c8 == 0)
        out_ref[...] = (acc_ref[...] * tp_inv_n + jnp.where(onehot, sl_term, 0.0))[None]


def _lane_blocks(p, t):
    """Flatten to a lane-dense (rows, 128) view.

    When numel % 128 == 0 this is a free metadata reshape (no HBM copy).
    Otherwise only the sub-row tail is padded to the next multiple of 128 with
    (p=1, t=1), which contributes exactly zero to the focal-BCE sum; the mean
    is renormalized with the true count.  Never pads to a tile multiple.
    Input dtypes are preserved (targets may be bf16/int; cast in-kernel).
    """
    p_flat = p.reshape(-1)
    t_flat = t.reshape(-1)
    n = int(p_flat.shape[0])
    rows = pl.cdiv(n, _LANE)
    pad = rows * _LANE - n
    if pad:
        p_flat = jnp.pad(p_flat, (0, pad), constant_values=1)
        t_flat = jnp.pad(t_flat, (0, pad), constant_values=1)
    return p_flat.reshape(rows, _LANE), t_flat.reshape(rows, _LANE), n


def _max_tile_rows():
    """Row-tile cap per chip generation.  Two double-buffered tp streams cost
    tile_rows * 2 KiB of VMEM:
        8192 rows -> ~16 MiB   (v6e / v7x: big tiles hide per-step overhead)
        2048 rows -> ~ 4 MiB   (v5e / older / unknown: already near roofline)
    In-kernel compute is chunked, so temporaries stay small either way.
    """
    try:
        kind = jax.devices()[0].device_kind.lower()
    except Exception:
        kind = ""
    if any(tag in kind for tag in ("v6", "v7", "7x")):
        return 8192
    return 2048


def probabilistic_trading_loss(predictions, targets):
    """predictions/targets: dicts with 'tp_probs'/'tp_targets' (B, L) and
    'sl_prob'/'sl_target' (B, 1), hard {0,1} targets.  Returns scalar f32."""
    tp_p2, tp_t2, n_tp = _lane_blocks(predictions["tp_probs"], targets["tp_targets"])
    sl_p2, sl_t2, n_sl = _lane_blocks(predictions["sl_prob"], targets["sl_target"])

    rows = tp_p2.shape[0]
    rows_sl = sl_p2.shape[0]

    max_rows = _max_tile_rows()
    if rows >= _CHUNK_ROWS:
        chunk_rows = _CHUNK_ROWS
        tile_rows = min(max_rows, pl.cdiv(rows, _CHUNK_ROWS) * _CHUNK_ROWS)
    else:
        tile_rows = pl.cdiv(rows, 32) * 32      # tiny input: single small tile
        chunk_rows = tile_rows

    steps = pl.cdiv(rows, tile_rows)            # total row tiles
    spc = pl.cdiv(steps, 2)                     # tiles per half (per TC on v7x)

    kernel = functools.partial(
        _trading_loss_kernel,
        tile_rows=tile_rows, chunk_rows=chunk_rows, rows=rows,
        tp_inv_n=1.0 / n_tp, sl_inv_n=1.0 / n_sl)

    def tp_map(c, i):
        # Clamp so a block never starts past the array; an overshoot tile (odd
        # step counts) re-reads the last tile and is fully masked in-kernel.
        return (jnp.minimum(c * spc + i, steps - 1), 0)

    partials = pl.pallas_call(
        kernel,
        out_shape=jax.ShapeDtypeStruct((2, 8, _LANE), jnp.float32),
        grid_spec=pltpu.PrefetchScalarGridSpec(
            num_scalar_prefetch=0,
            grid=(2, spc),
            in_specs=[
                pl.BlockSpec((tile_rows, _LANE), tp_map),
                pl.BlockSpec((tile_rows, _LANE), tp_map),
                pl.BlockSpec((rows_sl, _LANE), lambda c, i: (0, 0)),   # resident
                pl.BlockSpec((rows_sl, _LANE), lambda c, i: (0, 0)),   # resident
            ],
            out_specs=pl.BlockSpec((1, 8, _LANE), lambda c, i: (c, 0, 0)),
            scratch_shapes=[pltpu.VMEM((8, _LANE), jnp.float32)],
        ),
        compiler_params=pltpu.CompilerParams(
            dimension_semantics=("parallel", "arbitrary"),
            vmem_limit_bytes=48 * 1024 * 1024),   # headroom for 8192-row tiles
    )(tp_p2, tp_t2, sl_p2, sl_t2)

    # Tiny (2,8,128) final reduce: combines both halves' pre-normalized tp
    # partials plus the sl term carried in element [0,0,0].
    return jnp.sum(partials)


def _reference(predictions, targets):
    """Pure-JAX reference mirroring the PyTorch module (two-term clamped BCE)."""
    def focal(p, t, g):
        p = p.astype(jnp.float32)
        t = t.astype(jnp.float32)
        bce = -(t * jnp.maximum(jnp.log(p), -100.0)
                + (1.0 - t) * jnp.maximum(jnp.log(1.0 - p), -100.0))
        pt = jnp.where(t == 1.0, p, 1.0 - p)
        return jnp.mean(((1.0 - pt) ** g) * bce)

    return (focal(predictions["tp_probs"], targets["tp_targets"], FOCAL_GAMMA)
            + SL_WEIGHT * focal(predictions["sl_prob"], targets["sl_target"], SL_GAMMA))


if __name__ == "__main__":
    key = jax.random.PRNGKey(0)
    k1, k2, k3, k4 = jax.random.split(key, 4)

    batch, num_tp_levels = 8, 4

    tp_probs = jax.nn.sigmoid(jax.random.normal(k1, (batch, num_tp_levels), jnp.float32))
    tp_targets = jax.random.bernoulli(k2, 0.5, (batch, num_tp_levels)).astype(jnp.float32)
    sl_prob = jax.nn.sigmoid(jax.random.normal(k3, (batch, 1), jnp.float32))
    sl_target = jax.random.bernoulli(k4, 0.3, (batch, 1)).astype(jnp.float32)

    predictions = {"tp_probs": tp_probs, "sl_prob": sl_prob}
    targets = {"tp_targets": tp_targets, "sl_target": sl_target}

    loss = probabilistic_trading_loss(predictions, targets)
    jax.block_until_ready(loss)

    ref = _reference(predictions, targets)
    assert jnp.allclose(loss, ref, rtol=1e-5, atol=1e-5), (loss, ref)

    print("KERNEL_OK")
</pallas_src>

<mosaic_0001>
module attributes {stable_mosaic.version = 11 : i64} {
  func.func @_trading_loss_kernel(%arg0: i32, %arg1: i32, %arg2: memref<32x128xf32, #tpu.memory_space<vmem>>, %arg3: memref<32x128xf32, #tpu.memory_space<vmem>>, %arg4: memref<1x128xf32, #tpu.memory_space<vmem>>, %arg5: memref<1x128xf32, #tpu.memory_space<vmem>>, %arg6: memref<1x8x128xf32, #tpu.memory_space<vmem>>, %arg7: memref<8x128xf32, #tpu.memory_space<vmem>>) attributes {dimension_semantics = [#tpu.dimension_semantics<parallel>, #tpu.dimension_semantics<arbitrary>], iteration_bounds = array<i64: 2, 1>, scalar_prefetch = 0 : i64, scratch_operands = 1 : i64, tpu.core_type = #tpu.core_type<tc>, window_params = [{transform_indices = @transform_0, window_bounds = array<i64: 32, 128>}, {transform_indices = @transform_1, window_bounds = array<i64: 32, 128>}, {pipeline_mode = #tpu.pipeline_mode<synchronous>, transform_indices = @transform_2, window_bounds = array<i64: 1, 128>}, {pipeline_mode = #tpu.pipeline_mode<synchronous>, transform_indices = @transform_3, window_bounds = array<i64: 1, 128>}, {transform_indices = @transform_4, window_bounds = array<i64: 1, 8, 128>}]} {
    %c1_i32 = arith.constant 1 : i32
    %0 = arith.muli %arg0, %c1_i32 : i32
    %1 = arith.addi %0, %arg1 : i32
    %c0_i32 = arith.constant 0 : i32
    %2 = arith.cmpi eq, %arg1, %c0_i32 : i32
    %3 = arith.extui %2 : i1 to i32
    %c0_i32_0 = arith.constant 0 : i32
    %4 = arith.cmpi ne, %3, %c0_i32_0 : i32
    scf.if %4 {
      %cst_20 = arith.constant 0.000000e+00 : f32
      %44 = vector.broadcast %cst_20 : f32 to vector<8x128xf32>
      %c0_21 = arith.constant 0 : index
      %c0_22 = arith.constant 0 : index
      %45 = vector.load %arg7[%c0_21, %c0_22] : memref<8x128xf32, #tpu.memory_space<vmem>>, vector<8x128xf32>
      tpu.vector_store %arg7[%c0_21, %c0_22], %44 {strides = array<i32>} : memref<8x128xf32, #tpu.memory_space<vmem>>, vector<8x128xf32>,
    } else {
    }
    %5 = tpu.iota {dimensions = array<i32: 0>} : vector<32x128xi32>
    %c32_i32 = arith.constant 32 : i32
    %6 = arith.muli %1, %c32_i32 : i32
    %c0_i32_1 = arith.constant 0 : i32
    %c1_i32_2 = arith.constant 1 : i32
    %7 = arith.muli %c0_i32_1, %c1_i32_2 : i32
    %c0_i32_3 = arith.constant 0 : i32
    %8 = arith.addi %c0_i32_3, %7 : i32
    %c32_i32_4 = arith.constant 32 : i32
    %9 = arith.muli %8, %c32_i32_4 : i32
    %10 = tpu.assume_multiple %9, 32 : i32
    %11 = arith.index_cast %10 : i32 to index
    %c0 = arith.constant 0 : index
    %12 = vector.load %arg2[%11, %c0] : memref<32x128xf32, #tpu.memory_space<vmem>>, vector<32x128xf32>
    %13 = arith.index_cast %10 : i32 to index
    %c0_5 = arith.constant 0 : index
    %14 = vector.load %arg3[%13, %c0_5] : memref<32x128xf32, #tpu.memory_space<vmem>>, vector<32x128xf32>
    %cst = arith.constant 1.000000e+00 : f32
    %15 = vector.broadcast %cst : f32 to vector<32x128xf32>
    %16 = arith.cmpf oeq, %14, %15 : vector<32x128xf32>
    %cst_6 = arith.constant 1.000000e+00 : f32
    %17 = vector.broadcast %cst_6 : f32 to vector<32x128xf32>
    %18 = arith.subf %17, %12 : vector<32x128xf32>
    %19 = arith.select %16, %12, %18 : vector<32x128xi1>, vector<32x128xf32>
    %20 = math.log %19 : vector<32x128xf32>
    %cst_7 = arith.constant -1.000000e+02 : f32
    %21 = vector.broadcast %cst_7 : f32 to vector<32x128xf32>
    %22 = arith.maximumf %20, %21 : vector<32x128xf32>
    %cst_8 = arith.constant 0.000000e+00 : f32
    %23 = vector.broadcast %cst_8 : f32 to vector<32x128xf32>
    %24 = arith.subf %23, %22 : vector<32x128xf32>
    %cst_9 = arith.constant 1.000000e+00 : f32
    %25 = vector.broadcast %cst_9 : f32 to vector<32x128xf32>
    %26 = arith.subf %25, %19 : vector<32x128xf32>
    %27 = arith.mulf %26, %26 : vector<32x128xf32>
    %28 = arith.mulf %27, %24 : vector<32x128xf32>
    %29 = arith.addi %6, %10 : i32
    %30 = vector.broadcast %29 : i32 to vector<32x128xi32>
    %31 = arith.addi %30, %5 : vector<32x128xi32>
    %c1_i32_10 = arith.constant 1 : i32
    %32 = vector.broadcast %c1_i32_10 : i32 to vector<32x128xi32>
    %33 = arith.cmpi slt, %31, %32 : vector<32x128xi32>
    %cst_11 = arith.constant 0.000000e+00 : f32
    %34 = vector.broadcast %cst_11 : f32 to vector<32x128xf32>
    %35 = arith.select %33, %28, %34 : vector<32x128xi1>, vector<32x128xf32>
    %c0_12 = arith.constant 0 : index
    %c0_13 = arith.constant 0 : index
    %36 = vector.load %arg7[%c0_12, %c0_13] : memref<8x128xf32, #tpu.memory_space<vmem>>, vector<8x128xf32>
    %37 = vector.shape_cast %35 : vector<32x128xf32> to vector<4x8x128xf32>
    %cst_14 = arith.constant dense<0.000000e+00> : vector<8x128xf32>
    %38 = vector.multi_reduction <add>, %37, %cst_14 [0] : vector<4x8x128xf32> to vector<8x128xf32>
    %39 = arith.addf %36, %38 : vector<8x128xf32>
    %c0_15 = arith.constant 0 : index
    %c0_16 = arith.constant 0 : index
    %40 = vector.load %arg7[%c0_15, %c0_16] : memref<8x128xf32, #tpu.memory_space<vmem>>, vector<8x128xf32>
    tpu.vector_store %arg7[%c0_15, %c0_16], %39 {strides = array<i32>} : memref<8x128xf32, #tpu.memory_space<vmem>>, vector<8x128xf32>,
    %c1_i32_17 = arith.constant 1 : i32
    %c0_i32_18 = arith.constant 0 : i32
    %41 = arith.cmpi eq, %arg1, %c0_i32_18 : i32
    %42 = arith.extui %41 : i1 to i32
    %c0_i32_19 = arith.constant 0 : i32
    %43 = arith.cmpi ne, %42, %c0_i32_19 : i32
    scf.if %43 {
      %c0_20 = arith.constant 0 : index
      %c0_21 = arith.constant 0 : index
      %44 = vector.load %arg4[%c0_20, %c0_21] : memref<1x128xf32, #tpu.memory_space<vmem>>, vector<1x128xf32>
      %c0_22 = arith.constant 0 : index
      %c0_23 = arith.constant 0 : index
      %45 = vector.load %arg5[%c0_22, %c0_23] : memref<1x128xf32, #tpu.memory_space<vmem>>, vector<1x128xf32>
      %cst_24 = arith.constant 1.000000e+00 : f32
      %46 = vector.broadcast %cst_24 : f32 to vector<1x128xf32>
      %47 = arith.cmpf oeq, %45, %46 : vector<1x128xf32>
      %cst_25 = arith.constant 1.000000e+00 : f32
      %48 = vector.broadcast %cst_25 : f32 to vector<1x128xf32>
      %49 = arith.subf %48, %44 : vector<1x128xf32>
      %50 = arith.select %47, %44, %49 : vector<1x128xi1>, vector<1x128xf32>
      %51 = math.log %50 : vector<1x128xf32>
      %cst_26 = arith.constant -1.000000e+02 : f32
      %52 = vector.broadcast %cst_26 : f32 to vector<1x128xf32>
      %53 = arith.maximumf %51, %52 : vector<1x128xf32>
      %cst_27 = arith.constant 0.000000e+00 : f32
      %54 = vector.broadcast %cst_27 : f32 to vector<1x128xf32>
      %55 = arith.subf %54, %53 : vector<1x128xf32>
      %cst_28 = arith.constant 1.000000e+00 : f32
      %56 = vector.broadcast %cst_28 : f32 to vector<1x128xf32>
      %57 = arith.subf %56, %50 : vector<1x128xf32>
      %58 = arith.mulf %57, %57 : vector<1x128xf32>
      %59 = arith.mulf %58, %57 : vector<1x128xf32>
      %60 = arith.mulf %59, %55 : vector<1x128xf32>
      %61 = vector.shape_cast %60 : vector<1x128xf32> to vector<1x1x128xf32>
      %cst_29 = arith.constant dense<0.000000e+00> : vector<1xf32>
      %62 = vector.multi_reduction <add>, %61, %cst_29 [1, 2] : vector<1x1x128xf32> to vector<1xf32>
      %63 = vector.shape_cast %62 : vector<1xf32> to vector<1x1x1xf32>
      %64 = vector.extract %63[0, 0, 0] : f32 from vector<1x1x1xf32>
      %c0_i32_30 = arith.constant 0 : i32
      %65 = arith.cmpi eq, %arg0, %c0_i32_30 : i32
      %cst_31 = arith.constant 1.250000e-01 : f32
      %66 = arith.mulf %64, %cst_31 : f32
      %cst_32 = arith.constant 1.500000e+00 : f32
      %67 = arith.mulf %cst_32, %66 : f32
      %cst_33 = arith.constant 0.000000e+00 : f32
      %68 = arith.select %65, %67, %cst_33 : f32
      %69 = tpu.iota {dimensions = array<i32: 0>} : vector<8x128xi32>
      %70 = tpu.iota {dimensions = array<i32: 1>} : vector<8x128xi32>
      %c0_i32_34 = arith.constant 0 : i32
      %71 = vector.broadcast %c0_i32_34 : i32 to vector<8x128xi32>
      %72 = arith.cmpi eq, %69, %71 : vector<8x128xi32>
      %c0_i32_35 = arith.constant 0 : i32
      %73 = vector.broadcast %c0_i32_35 : i32 to vector<8x128xi32>
      %74 = arith.cmpi eq, %70, %73 : vector<8x128xi32>
      %75 = arith.andi %72, %74 : vector<8x128xi1>
      %c0_36 = arith.constant 0 : index
      %c0_37 = arith.constant 0 : index
      %76 = vector.load %arg7[%c0_36, %c0_37] : memref<8x128xf32, #tpu.memory_space<vmem>>, vector<8x128xf32>
      %cst_38 = arith.constant 3.125000e-02 : f32
      %77 = vector.broadcast %cst_38 : f32 to vector<8x128xf32>
      %78 = arith.mulf %76, %77 : vector<8x128xf32>
      %cst_39 = arith.constant 0.000000e+00 : f32
      %79 = vector.broadcast %68 : f32 to vector<8x128xf32>
      %80 = vector.broadcast %cst_39 : f32 to vector<8x128xf32>
      %81 = arith.select %75, %79, %80 : vector<8x128xi1>, vector<8x128xf32>
      %82 = arith.addf %78, %81 : vector<8x128xf32>
      %83 = vector.shape_cast %82 : vector<8x128xf32> to vector<1x8x128xf32>
      %c0_40 = arith.constant 0 : index
      %c0_41 = arith.constant 0 : index
      %c0_42 = arith.constant 0 : index
      %84 = vector.load %arg6[%c0_40, %c0_41, %c0_42] : memref<1x8x128xf32, #tpu.memory_space<vmem>>, vector<1x8x128xf32>
      tpu.vector_store %arg6[%c0_40, %c0_41, %c0_42], %83 {strides = array<i32>} : memref<1x8x128xf32, #tpu.memory_space<vmem>>, vector<1x8x128xf32>,
    } else {
    }
    return
  }
  func.func @transform_0(%arg0: i32, %arg1: i32) -> (i32, i32) {
    %c1_i32 = arith.constant 1 : i32
    %0 = arith.muli %arg0, %c1_i32 : i32
    %1 = arith.addi %0, %arg1 : i32
    %c0_i32 = arith.constant 0 : i32
    %2 = arith.minsi %1, %c0_i32 : i32
    %c0_i32_0 = arith.constant 0 : i32
    %c0_i32_1 = arith.constant 0 : i32
    return %2, %c0_i32_0 : i32, i32
  }
  func.func @transform_1(%arg0: i32, %arg1: i32) -> (i32, i32) {
    %c1_i32 = arith.constant 1 : i32
    %0 = arith.muli %arg0, %c1_i32 : i32
    %1 = arith.addi %0, %arg1 : i32
    %c0_i32 = arith.constant 0 : i32
    %2 = arith.minsi %1, %c0_i32 : i32
    %c0_i32_0 = arith.constant 0 : i32
    %c0_i32_1 = arith.constant 0 : i32
    return %2, %c0_i32_0 : i32, i32
  }
  func.func @transform_2(%arg0: i32, %arg1: i32) -> (i32, i32) {
    %c0_i32 = arith.constant 0 : i32
    %c0_i32_0 = arith.constant 0 : i32
    %c0_i32_1 = arith.constant 0 : i32
    return %c0_i32, %c0_i32_0 : i32, i32
  }
  func.func @transform_3(%arg0: i32, %arg1: i32) -> (i32, i32) {
    %c0_i32 = arith.constant 0 : i32
    %c0_i32_0 = arith.constant 0 : i32
    %c0_i32_1 = arith.constant 0 : i32
    return %c0_i32, %c0_i32_0 : i32, i32
  }
  func.func @transform_4(%arg0: i32, %arg1: i32) -> (i32, i32, i32) {
    %c0_i32 = arith.constant 0 : i32
    %c0_i32_0 = arith.constant 0 : i32
    %c0_i32_1 = arith.constant 0 : i32
    return %arg0, %c0_i32, %c0_i32_0 : i32, i32, i32
  }
}

</mosaic_0001>

<llo_original>
// kernel: tpu_custom_call.1
$region0: #{tpu_custom_call.1}
  #allocation0 [shape = 'u32[]', space=smem, size = 0x4, offset = 0x4, fixed_abs, tag = 'smem constant byte address 0x4 - core index']
  #allocation1 [shape = 'u32[72,128]{1,0:T(1,128)}', space=vmem, size = 0x9000, scoped, tag = 'internal scratch']
  #allocation2 [shape = 'f32[8,128]{1,0:T(8,128)}', space=vmem, size = 0x1000, scoped, tag = 'scratch operand']
  %s0 = inlined_call_operand.hbm [shape: f32[1,128], index: 0, kind: input, shape index: {}]
  %s1 = inlined_call_operand.hbm [shape: f32[1,128], index: 1, kind: input, shape index: {}]
  %s2 = inlined_call_operand.vmem [shape: f32[1,128], index: 2, kind: input, shape index: {}]
  %s3 = inlined_call_operand.vmem [shape: f32[1,128], index: 3, kind: input, shape index: {}]
  %s4 = inlined_call_operand.hbm [shape: f32[2,8,128], index: 4, kind: output, shape index: {}]
  %s5 = sld [smem:[#allocation0]]
  $region65: #{tpu_custom_call.1} parent=0
    _
  %s7 = ssub.s32 1, %s5
  %s8 = scalar_select 0, %s7, %s5
  $region1: #{tpu_custom_call.1} parent=0
    #allocation3 [shape = 'u8[32768]{0}', space=vmem, size = 0x8000, scoped, tag = 'input window, operand 0']
    #allocation4 [shape = 's32[2]{0}', space=sflag, size = 0x8, scoped, tag = 'scoped memory for tpu_custom_call.1']
    #allocation5 [shape = 's32[2]{0}', space=sflag, size = 0x8, scoped, tag = 'scoped memory for tpu_custom_call.1']
    #allocation6 [shape = 'u8[32768]{0}', space=vmem, size = 0x8000, scoped, tag = 'input window, operand 1']
    #allocation7 [shape = 's32[2]{0}', space=sflag, size = 0x8, scoped, tag = 'scoped memory for tpu_custom_call.1']
    #allocation8 [shape = 'u8[8192]{0}', space=vmem, size = 0x2000, scoped, tag = 'output window, operand 0']
    %9 = vsyncpa [#allocation4], 0
    %s10 = scalar_lea.sflag [#allocation4], 1
    %11 = vsyncpa %s10, 0
    %12 = vsyncpa [#allocation7], 0
    %s13 = scalar_lea.sflag [#allocation7], 1
    %14 = vsyncpa %s13, 0
    %15 = vsyncpa [#allocation5], 0
    %s16 = scalar_lea.sflag [#allocation5], 1
    %17 = vsyncpa %s16, 0
    loop: start=0, step=1, limit=4
    $region2: #{tpu_custom_call.1} parent=1 // loop_pre_header
      _
    $region3: #{tpu_custom_call.1} parent=1 // loop_header
      %s19 = sphi 0, %s23
      %p20 = scmp.ge.s32.totalorder %s19, 4
      %s26 = sphi 0, %s38
      %s27 = sphi 0, %s34
      %s28 = sphi 0, %s26
      %s29 = sphi 0, %s27
      %s30 = sphi 0, %s28
      %s31 = sphi 0, %s29
      %s47 = sphi 0, %s49
      %s50 = sphi 0, %s47
      %s51 = sphi 0, %s50
      %s67 = sphi 0, %s51
      %s79 = sphi 0, %s81
      %s82 = sphi 0, %s79
      %s83 = sphi 0, %s82
      %s99 = sphi 0, %s83
      %s103 = sphi 0, %s103
      %s105 = sphi 0, %s103
      %s106 = sphi 0, %s105
      %s120 = sphi 0, %s106
      %s124 = sphi 0, %s124
      %s126 = sphi 0, %s124
      %s127 = sphi 0, %s126
      %s141 = sphi 0, %s127
      %s147 = sphi 0, %s149
      %s150 = sphi 0, %s147
      %s151 = sphi 0, %s150
      %s167 = sphi 0, %s151
    $region4: #{tpu_custom_call.1} parent=1 // loop_header_branch
      %22 = sbr.rel (%p20) target = $region8
    $region5: #{tpu_custom_call.1} parent=1 // loop_body
      %s24 = ssub.s32 %s19, 1
      %s25 = ssub.s32 %s19, 2
      %s32 = sadd.s32 1, %s27
      %p33 = scmp.ge.s32.totalorder %s32, 1
      %s34 = scalar_select %p33, 0, %s32
      %s35 = sadd.s32 1, %s26
      %s36 = scalar_select %p33, %s35, %s26
      %p37 = scmp.ge.s32.totalorder %s36, 2
      %s38 = scalar_select %p37, 0, %s36
      %s39 = sadd.s32 %s26, %s27
      %p40 = scmp.lt.s32.totalorder %s39, 0
      %s41 = scalar_select %p40, %s39, 0
      %s42 = sadd.s32 %s38, %s34
      %p43 = scmp.lt.s32.totalorder %s42, 0
      %s44 = scalar_select %p43, %s42, 0
      %s45 = ssub.s32 %s41, %s44
      %p46 = scmp.eq.s32.totalorder %s45, 0
      %s48 = sadd.s32 %s47, 1
      %s49 = scalar_select %p46, %s47, %s48
      %p52 = pneg %p46
      %p53 = scmp.eq.s32.totalorder %s19, 1
      %p54 = por %p52, %p53
      %p55 = scmp.ne.s32.totalorder %s47, %s50
      %p56 = scmp.eq.s32.totalorder %s19, 0
      %p57 = por %p55, %p56
      %p58 = scmp.ne.s32.totalorder %s47, %s50
      %p59 = scmp.eq.s32.totalorder %s24, 1
      %p60 = por %p58, %p59
      %p61 = scmp.ne.s32.totalorder %s50, %s51
      %p62 = scmp.eq.s32.totalorder %s24, 0
      %p63 = por %p61, %p62
      %p64 = scmp.ne.s32.totalorder %s50, %s51
      %p65 = scmp.eq.s32.totalorder %s25, 1
      %p66 = por %p64, %p65
      %p68 = scmp.ne.s32.totalorder %s51, %s67
      %p69 = scmp.eq.s32.totalorder %s25, 0
      %p70 = por %p68, %p69
      %s71 = sadd.s32 %s26, %s27
      %p72 = scmp.lt.s32.totalorder %s71, 0
      %s73 = scalar_select %p72, %s71, 0
      %s74 = sadd.s32 %s38, %s34
      %p75 = scmp.lt.s32.totalorder %s74, 0
      %s76 = scalar_select %p75, %s74, 0
      %s77 = ssub.s32 %s73, %s76
      %p78 = scmp.eq.s32.totalorder %s77, 0
      %s80 = sadd.s32 %s79, 1
      %s81 = scalar_select %p78, %s79, %s80
      %p84 = pneg %p78
      %p85 = scmp.eq.s32.totalorder %s19, 1
      %p86 = por %p84, %p85
      %p87 = scmp.ne.s32.totalorder %s79, %s82
      %p88 = scmp.eq.s32.totalorder %s19, 0
      %p89 = por %p87, %p88
      %p90 = scmp.ne.s32.totalorder %s79, %s82
      %p91 = scmp.eq.s32.totalorder %s24, 1
      %p92 = por %p90, %p91
      %p93 = scmp.ne.s32.totalorder %s82, %s83
      %p94 = scmp.eq.s32.totalorder %s24, 0
      %p95 = por %p93, %p94
      %p96 = scmp.ne.s32.totalorder %s82, %s83
      %p97 = scmp.eq.s32.totalorder %s25, 1
      %p98 = por %p96, %p97
      %p100 = scmp.ne.s32.totalorder %s83, %s99
      %p101 = scmp.eq.s32.totalorder %s25, 0
      %p102 = por %p100, %p101
      %s104 = sadd.s32 %s103, 1
      %p107 = scmp.eq.s32.totalorder %s19, 1
      %p108 = scmp.ne.s32.totalorder %s103, %s105
      %p109 = scmp.eq.s32.totalorder %s19, 0
      %p110 = por %p108, %p109
      %p111 = scmp.ne.s32.totalorder %s103, %s105
      %p112 = scmp.eq.s32.totalorder %s24, 1
      %p113 = por %p111, %p112
      %p114 = scmp.ne.s32.totalorder %s105, %s106
      %p115 = scmp.eq.s32.totalorder %s24, 0
      %p116 = por %p114, %p115
      %p117 = scmp.ne.s32.totalorder %s105, %s106
      %p118 = scmp.eq.s32.totalorder %s25, 1
      %p119 = por %p117, %p118
      %p121 = scmp.ne.s32.totalorder %s106, %s120
      %p122 = scmp.eq.s32.totalorder %s25, 0
      %p123 = por %p121, %p122
      %s125 = sadd.s32 %s124, 1
      %p128 = scmp.eq.s32.totalorder %s19, 1
      %p129 = scmp.ne.s32.totalorder %s124, %s126
      %p130 = scmp.eq.s32.totalorder %s19, 0
      %p131 = por %p129, %p130
      %p132 = scmp.ne.s32.totalorder %s124, %s126
      %p133 = scmp.eq.s32.totalorder %s24, 1
      %p134 = por %p132, %p133
      %p135 = scmp.ne.s32.totalorder %s126, %s127
      %p136 = scmp.eq.s32.totalorder %s24, 0
      %p137 = por %p135, %p136
      %p138 = scmp.ne.s32.totalorder %s126, %s127
      %p139 = scmp.eq.s32.totalorder %s25, 1
      %p140 = por %p138, %p139
      %p142 = scmp.ne.s32.totalorder %s127, %s141
      %p143 = scmp.eq.s32.totalorder %s25, 0
      %p144 = por %p142, %p143
      %s145 = ssub.s32 %s26, %s38
      %p146 = scmp.eq.s32.totalorder %s145, 0
      %s148 = sadd.s32 %s147, 1
      %s149 = scalar_select %p146, %s147, %s148
      %p152 = pneg %p146
      %p153 = scmp.eq.s32.totalorder %s19, 1
      %p154 = por %p152, %p153
      %p155 = scmp.ne.s32.totalorder %s147, %s150
      %p156 = scmp.eq.s32.totalorder %s19, 0
      %p157 = por %p155, %p156
      %p158 = scmp.ne.s32.totalorder %s147, %s150
      %p159 = scmp.eq.s32.totalorder %s24, 1
      %p160 = por %p158, %p159
      %p161 = scmp.ne.s32.totalorder %s150, %s151
      %p162 = scmp.eq.s32.totalorder %s24, 0
      %p163 = por %p161, %p162
      %p164 = scmp.ne.s32.totalorder %s150, %s151
      %p165 = scmp.eq.s32.totalorder %s25, 1
      %p166 = por %p164, %p165
      %p168 = scmp.ne.s32.totalorder %s151, %s167
      %p169 = scmp.eq.s32.totalorder %s25, 0
      %p170 = por %p168, %p169
      %p171 = scmp.le.s32.totalorder 1, %s19
      %p172 = scmp.lt.s32.totalorder %s19, 3
      %p173 = pnand %p171, %p172
      %p174 = pneg %p173
      // Predicated region
      $region9: #{tpu_custom_call.1} parent=5 // pred_check
        _
      $region10: #{tpu_custom_call.1} parent=5 // pred_check_branch
        %176 = sbr.rel (%p173) target = $region12
      $region11: #{tpu_custom_call.1} parent=5 // pred_region
        %s177 = ssub.s32 %s19, 1
        // Predicated region
        $region13: #{tpu_custom_call.1} parent=11 // pred_check
          %p178 = pneg %p116
        $region14: #{tpu_custom_call.1} parent=11 // pred_check_branch
          %180 = sbr.rel (%p178) target = $region16
        $region15: #{tpu_custom_call.1} parent=11 // pred_region
          _
        $region16: #{tpu_custom_call.1} parent=11 // pred_fallthru
          _
        // Predicated region
        $region17: #{tpu_custom_call.1} parent=11 // pred_check
          %p181 = pneg %p137
        $region18: #{tpu_custom_call.1} parent=11 // pred_check_branch
          %183 = sbr.rel (%p181) target = $region20
        $region19: #{tpu_custom_call.1} parent=11 // pred_region
          _
        $region20: #{tpu_custom_call.1} parent=11 // pred_fallthru
          _
      $region12: #{tpu_custom_call.1} parent=5 // pred_fallthru
        _
      %p184 = scmp.lt.s32.totalorder %s19, 2
      // Predicated region
      $region21: #{tpu_custom_call.1} parent=5 // pred_check
        %p185 = pneg %p184
      $region22: #{tpu_custom_call.1} parent=5 // pred_check_branch
        %187 = sbr.rel (%p185) target = $region24
      $region23: #{tpu_custom_call.1} parent=5 // pred_region
        // Predicated region
        $region25: #{tpu_custom_call.1} parent=23 // pred_check
          %p188 = pneg %p57
        $region26: #{tpu_custom_call.1} parent=23 // pred_check_branch
          %190 = sbr.rel (%p188) target = $region28
        $region27: #{tpu_custom_call.1} parent=23 // pred_region
          %s191 = sand.u32 %s47, 1
          %s192 = scalar_lea.sflag [#allocation4], %s191
          %s193 = sand.u32 %s47, 1
          %s194 = smul.addr %s193, 32
          %s195 = scalar_lea.vmem [#allocation3], %s194
          %s196 = sadd.s32 %s26, %s27
          %p197 = scmp.lt.s32.totalorder %s196, 0
          %s198 = scalar_select %p197, %s196, 0
          %s199 = smul.u32 32, %s198
          %s200 = ssub.s32 1, %s199
          %s201 = ssub.s32 32, %s200
          %s202 = sshll.u32 %s201, 4
          %203 = vsyncadd %s192, %s202
          %p204 = scmp.ne.s32.totalorder 0, %s200
          %s205 = scalar_lea.hbm %s0, %s199
          %s206 = sshll.u32 %s205, 4
          %s207 = int_to_ptr.hbm [resolvable:$true] %s206
          %s208 = sshll.u32 %s195, 4
          %s209 = int_to_ptr.vmem [resolvable:$true] %s208
          %s210 = sshll.u32 %s200, 4
          %214 = dma.hbm_to_vmem [thread:$0]  (%p204), %s207, %s210, %s209, %s192, 16, 16, 1
        $region28: #{tpu_custom_call.1} parent=23 // pred_fallthru
          _
        // Predicated region
        $region29: #{tpu_custom_call.1} parent=23 // pred_check
          %p215 = pneg %p89
        $region30: #{tpu_custom_call.1} parent=23 // pred_check_branch
          %217 = sbr.rel (%p215) target = $region32
        $region31: #{tpu_custom_call.1} parent=23 // pred_region
          %s218 = sand.u32 %s79, 1
          %s219 = scalar_lea.sflag [#allocation7], %s218
          %s220 = sand.u32 %s79, 1
          %s221 = smul.addr %s220, 32
          %s222 = scalar_lea.vmem [#allocation6], %s221
          %s223 = sadd.s32 %s26, %s27
          %p224 = scmp.lt.s32.totalorder %s223, 0
          %s225 = scalar_select %p224, %s223, 0
          %s226 = smul.u32 32, %s225
          %s227 = ssub.s32 1, %s226
          %s228 = ssub.s32 32, %s227
          %s229 = sshll.u32 %s228, 4
          %230 = vsyncadd %s219, %s229
          %p231 = scmp.ne.s32.totalorder 0, %s227
          %s232 = scalar_lea.hbm %s1, %s226
          %s233 = sshll.u32 %s232, 4
          %s234 = int_to_ptr.hbm [resolvable:$true] %s233
          %s235 = sshll.u32 %s222, 4
          %s236 = int_to_ptr.vmem [resolvable:$true] %s235
          %s237 = sshll.u32 %s227, 4
          %241 = dma.hbm_to_vmem [thread:$0]  (%p231), %s234, %s237, %s236, %s219, 16, 16, 1
        $region32: #{tpu_custom_call.1} parent=23 // pred_fallthru
          _
      $region24: #{tpu_custom_call.1} parent=5 // pred_fallthru
        _
      %p242 = scmp.le.s32.totalorder 1, %s19
      %p243 = scmp.lt.s32.totalorder %s19, 3
      %p244 = pnand %p242, %p243
      %p245 = pneg %p244
      // Predicated region
      $region33: #{tpu_custom_call.1} parent=5 // pred_check
        _
      $region34: #{tpu_custom_call.1} parent=5 // pred_check_branch
        %247 = sbr.rel (%p244) target = $region36
      $region35: #{tpu_custom_call.1} parent=5 // pred_region
        %s248 = ssub.s32 %s19, 1
        %s249 = sand.u32 %s50, 1
        %s250 = scalar_lea.sflag [#allocation4], %s249
        %s251 = sand.u32 %s50, 1
        %s252 = smul.addr %s251, 32
        %s253 = scalar_lea.vmem [#allocation3], %s252
        // Predicated region
        $region37: #{tpu_custom_call.1} parent=35 // pred_check
          %p254 = pneg %p63
        $region38: #{tpu_custom_call.1} parent=35 // pred_check_branch
          %256 = sbr.rel (%p254) target = $region40
        $region39: #{tpu_custom_call.1} parent=35 // pred_region
          %258 = dma.done %s250, 512
        $region40: #{tpu_custom_call.1} parent=35 // pred_fallthru
          _
        %s259 = sand.u32 %s82, 1
        %s260 = scalar_lea.sflag [#allocation7], %s259
        %s261 = sand.u32 %s82, 1
        %s262 = smul.addr %s261, 32
        %s263 = scalar_lea.vmem [#allocation6], %s262
        // Predicated region
        $region41: #{tpu_custom_call.1} parent=35 // pred_check
          %p264 = pneg %p95
        $region42: #{tpu_custom_call.1} parent=35 // pred_check_branch
          %266 = sbr.rel (%p264) target = $region44
        $region43: #{tpu_custom_call.1} parent=35 // pred_region
          %268 = dma.done %s260, 512
        $region44: #{tpu_custom_call.1} parent=35 // pred_fallthru
          _
        %s269 = sand.u32 %s50, 1
        %s270 = scalar_lea.sflag [#allocation4], %s269
        %s271 = sand.u32 %s50, 1
        %s272 = smul.addr %s271, 32
        %s273 = scalar_lea.vmem [#allocation3], %s272
        %p274 = pneg %p63
        %p275 = pneg %p60
        %s276 = sand.u32 %s82, 1
        %s277 = scalar_lea.sflag [#allocation7], %s276
        %s278 = sand.u32 %s82, 1
        %s279 = smul.addr %s278, 32
        %s280 = scalar_lea.vmem [#allocation6], %s279
        %p281 = pneg %p95
        %p282 = pneg %p92
        %p283 = pneg %p116
        %p284 = pneg %p113
        %p285 = pneg %p137
        %p286 = pneg %p134
        %p287 = pneg %p163
        %p288 = pneg %p160
        %s289 = sand.u32 %s150, 1
        %s290 = scalar_lea.sflag [#allocation5], %s289
        %s291 = sand.u32 %s150, 1
        %s292 = smul.addr %s291, 8
        %s293 = scalar_lea.vmem [#allocation8], %s292
        %s294 = sadd.s32 %s28, %s29
        %p295 = scmp.lt.s32.totalorder %s294, 0
        %s296 = scalar_select %p295, %s294, 0
        %s297 = smul.u32 32, %s296
        %s298 = ssub.s32 1, %s297
        %s299 = sadd.s32 %s28, %s29
        %p300 = scmp.lt.s32.totalorder %s299, 0
        %s301 = scalar_select %p300, %s299, 0
        %s302 = smul.u32 32, %s301
        %s303 = ssub.s32 1, %s302
        %s304 = sadd.s32 %s28, %s29
        %p305 = scmp.eq.s32.totalorder %s29, 0
        // Predicated region
        $region45: #{tpu_custom_call.1} parent=35 // pred_check
          %p306 = pneg %p305
        $region46: #{tpu_custom_call.1} parent=35 // pred_check_branch
          %308 = sbr.rel (%p306) target = $region48
        $region47: #{tpu_custom_call.1} parent=35 // pred_region
          %309 = vst [vmem:[#allocation2] sm:$0xff] 0.0
        $region48: #{tpu_custom_call.1} parent=35 // pred_fallthru
          _
        %v310 = vlaneseq
        %v311 = vshrl.u32 %v310, 7
        %v312 = vadd.s32 %v311, 8
        %v313 = vadd.s32 %v311, 16
        %v314 = vadd.s32 %v311, 24
        %s315 = smul.u32 %s304, 32
        %v316 = vld [vmem:[%s253] sm:$0xff]
        %v317 = vld [vmem:[%s253 + $0x8] sm:$0xff]
        %v318 = vld [vmem:[%s253 + $0x10] sm:$0xff]
        %v319 = vld [vmem:[%s253 + $0x18] sm:$0xff]
        %v320 = vld [vmem:[%s263] sm:$0xff]
        %v321 = vld [vmem:[%s263 + $0x8] sm:$0xff]
        %v322 = vld [vmem:[%s263 + $0x10] sm:$0xff]
        %v323 = vld [vmem:[%s263 + $0x18] sm:$0xff]
        %vm324 = vcmp.eq.f32.partialorder %v320, 1.0
        %vm325 = vcmp.eq.f32.partialorder %v321, 1.0
        %vm326 = vcmp.eq.f32.partialorder %v322, 1.0
        %vm327 = vcmp.eq.f32.partialorder %v323, 1.0
        %v328 = vsub.f32 1.0, %v316
        %v329 = vsub.f32 1.0, %v317
        %v330 = vsub.f32 1.0, %v318
        %v331 = vsub.f32 1.0, %v319
        %v332 = vsel %vm324, %v316, %v328
        %v333 = vsel %vm325, %v317, %v329
        %v334 = vsel %vm326, %v318, %v330
        %v335 = vsel %vm327, %v319, %v331
        %v336 = vlog2.pop %v332
        %v337 = vmul.f32 %v336, 0.6931472
        %v338 = vlog2.pop %v333
        %v339 = vmul.f32 %v338, 0.6931472
        %v340 = vlog2.pop %v334
        %v341 = vmul.f32 %v340, 0.6931472
        %v342 = vlog2.pop %v335
        %v343 = vmul.f32 %v342, 0.6931472
        %v344 = vmax.f32 %v337, -100.0
        %v345 = vmax.f32 %v339, -100.0
        %v346 = vmax.f32 %v341, -100.0
        %v347 = vmax.f32 %v343, -100.0
        %v348 = vsub.f32 0.0, %v344
        %v349 = vsub.f32 0.0, %v345
        %v350 = vsub.f32 0.0, %v346
        %v351 = vsub.f32 0.0, %v347
        %v352 = vsub.f32 1.0, %v332
        %v353 = vsub.f32 1.0, %v333
        %v354 = vsub.f32 1.0, %v334
        %v355 = vsub.f32 1.0, %v335
        %v356 = vmul.f32 %v352, %v352
        %v357 = vmul.f32 %v353, %v353
        %v358 = vmul.f32 %v354, %v354
        %v359 = vmul.f32 %v355, %v355
        %v360 = vmul.f32 %v356, %v348
        %v361 = vmul.f32 %v357, %v349
        %v362 = vmul.f32 %v358, %v350
        %v363 = vmul.f32 %v359, %v351
        %s364 = sadd.s32 %s315, 0
        %v365 = vstv %s364
        %v366 = vadd.s32 %v365, %v311
        %v367 = vadd.s32 %v365, %v312
        %v368 = vadd.s32 %v365, %v313
        %v369 = vadd.s32 %v365, %v314
        %vm370 = vcmp.lt.s32.totalorder %v366, 1
        %vm371 = vcmp.lt.s32.totalorder %v367, 1
        %vm372 = vcmp.lt.s32.totalorder %v368, 1
        %vm373 = vcmp.lt.s32.totalorder %v369, 1
        %v374 = vsel %vm370, %v360, 0.0
        %v375 = vsel %vm371, %v361, 0.0
        %v376 = vsel %vm372, %v362, 0.0
        %v377 = vsel %vm373, %v363, 0.0
        %v378 = vld [vmem:[#allocation2] sm:$0xff]
        %v379 = vadd.f32 %v374, %v375
        %v380 = vadd.f32 %v379, %v376
        %v381 = vadd.f32 %v380, %v377
        %v382 = vadd.f32 %v378, %v381
        %383 = vst [vmem:[#allocation2] sm:$0xff] %v382
        // Predicated region
        $region49: #{tpu_custom_call.1} parent=35 // pred_check
          %p384 = pneg %p305
        $region50: #{tpu_custom_call.1} parent=35 // pred_check_branch
          %386 = sbr.rel (%p384) target = $region52
        $region51: #{tpu_custom_call.1} parent=35 // pred_region
          %v387 = vld [vmem:[%s2] sm:$0x1]
          %v388 = vld [vmem:[%s3] sm:$0x1]
          %vm389 = vcmp.eq.f32.partialorder %v388, 1.0
          %v390 = vsub.f32 1.0, %v387
          %v391 = vsel %vm389, %v387, %v390
          %v392 = vlog2.pop %v391
          %v393 = vmul.f32 %v392, 0.6931472
          %v394 = vmax.f32 %v393, -100.0
          %v395 = vsub.f32 0.0, %v394
          %v396 = vsub.f32 1.0, %v391
          %v397 = vmul.f32 %v396, %v396
          %v398 = vmul.f32 %v397, %v396
          %v399 = vmul.f32 %v398, %v395
          %vm400 = vcmask 1040384
          %v401 = vsel %vm400, %v399, 0.0
          %402 = vadd.xlane.f32.xlu0 %v401
          %v403 = vpop.xlane.xlu0 %402
          %v404 = vrot.slane %v403, 4
          %v405 = vadd.f32 %v403, %v404
          %v406 = vrot.slane %v405, 2
          %v407 = vadd.f32 %v405, %v406
          %v408 = vrot.slane %v407, 1
          %v409 = vadd.f32 %v407, %v408
          %s410 = vtos %v409
          %p411 = scmp.eq.s32.totalorder %s28, 0
          %s412 = smul.f32 %s410, 0.125
          %s413 = smul.f32 %s412, 1.5
          %s414 = scalar_select %p411, %s413, 0.0
          %v415 = vlaneseq
          %v416 = vand.u32 %v415, 127
          %vm417 = vcmp.eq.s32.totalorder %v311, 0
          %vm418 = vcmp.eq.s32.totalorder %v416, 0
          %vm419 = vmand %vm417, %vm418
          %v420 = vld [vmem:[#allocation2] sm:$0xff]
          %v421 = vmul.f32 %v420, 0.03125
          %v422 = vstv %s414
          %v423 = vsel %vm419, %v422, 0.0
          %v424 = vadd.f32 %v421, %v423
          %425 = vst [vmem:[%s293] sm:$0xff] %v424
        $region52: #{tpu_custom_call.1} parent=35 // pred_fallthru
          _
        %s426 = sand.u32 %s150, 1
        %s427 = scalar_lea.sflag [#allocation5], %s426
        %s428 = sand.u32 %s150, 1
        %s429 = smul.addr %s428, 8
        %s430 = scalar_lea.vmem [#allocation8], %s429
        // Predicated region
        $region53: #{tpu_custom_call.1} parent=35 // pred_check
          %p431 = pneg %p160
        $region54: #{tpu_custom_call.1} parent=35 // pred_check_branch
          %433 = sbr.rel (%p431) target = $region56
        $region55: #{tpu_custom_call.1} parent=35 // pred_region
          %435 = vsyncadd %s427, 0
          %s436 = smul.addr %s28, 8
          %s437 = scalar_lea.hbm %s4, %s436
          %s439 = sshll.u32 %s430, 4
          %s440 = int_to_ptr.vmem [resolvable:$true] %s439
          %s441 = sshll.u32 %s437, 4
          %s442 = int_to_ptr.hbm [resolvable:$true] %s441
          %444 = dma.vmem_to_hbm [thread:$0]  %s440, 128, %s442, %s427
        $region56: #{tpu_custom_call.1} parent=35 // pred_fallthru
          _
      $region36: #{tpu_custom_call.1} parent=5 // pred_fallthru
        _
      %p445 = scmp.le.s32.totalorder 2, %s19
      // Predicated region
      $region57: #{tpu_custom_call.1} parent=5 // pred_check
        %p446 = pneg %p445
      $region58: #{tpu_custom_call.1} parent=5 // pred_check_branch
        %448 = sbr.rel (%p446) target = $region60
      $region59: #{tpu_custom_call.1} parent=5 // pred_region
        %s449 = ssub.s32 %s19, 2
        // Predicated region
        $region61: #{tpu_custom_call.1} parent=59 // pred_check
          %p450 = pneg %p166
        $region62: #{tpu_custom_call.1} parent=59 // pred_check_branch
          %452 = sbr.rel (%p450) target = $region64
        $region63: #{tpu_custom_call.1} parent=59 // pred_region
          %s453 = sand.u32 %s151, 1
          %s454 = scalar_lea.sflag [#allocation5], %s453
          %s455 = sand.u32 %s151, 1
          %s456 = smul.addr %s455, 8
          %s457 = scalar_lea.vmem [#allocation8], %s456
          %459 = dma.done %s454, 128
        $region64: #{tpu_custom_call.1} parent=59 // pred_fallthru
          _
      $region60: #{tpu_custom_call.1} parent=5 // pred_fallthru
        _
    $region6: #{tpu_custom_call.1} parent=1 // loop_footer
      %s23 = sadd.s32 1, %s19
    $region7: #{tpu_custom_call.1} parent=1 // loop_footer_branch
      %18 = sbr.rel target = $region3
    $region8: #{tpu_custom_call.1} parent=1 // loop_exit
      _
    %460 = vsyncpa [#allocation4], 1
    %s461 = scalar_lea.sflag [#allocation4], 1
    %462 = vsyncpa %s461, 1
    %463 = vsyncpa [#allocation7], 1
    %s464 = scalar_lea.sflag [#allocation7], 1
    %465 = vsyncpa %s464, 1
    %466 = vsyncpa [#allocation5], 1
    %s467 = scalar_lea.sflag [#allocation5], 1
    %468 = vsyncpa %s467, 1

</llo_original>
